<compile_context>
chip_gen: v7x
topology: tpu7x:2x2x1
jax: 0.10.0
libtpu: 0.0.40
codegen_flags: <defaults>
</compile_context>

<pallas_src>
import functools

import jax
import jax.numpy as jnp
import numpy as np
from jax import lax
from jax.experimental import pallas as pl
from jax.experimental.pallas import tpu as pltpu


def _round_up(n, m):
    return ((n + m - 1) // m) * m


def _pad_to(a, targets):
    """Zero-pad `a` so that axis k reaches size targets[k]."""
    widths = [(0, 0)] * a.ndim
    for ax, tgt in targets.items():
        widths[ax] = (0, tgt - a.shape[ax])
    if all(w == (0, 0) for w in widths):
        return a
    return jnp.pad(a, widths)


def _rnn_chunk_kernel(chunk_t, bp, alpha, unroll,
                      x_ref, w_in_ref, b_pre_ref, w_h_ref, w_fc_ref, b_fc_ref,
                      out_ref, act_ref,
                      h_ref):
    """One grid step = `chunk_t` timesteps of the recurrence.

    x_ref   : (chunk_t*bp, input_p)   -- this chunk's flattened (time, batch) rows
    act_ref : (chunk_t*bp, hidden_p)  -- holds xw after step (1), h after step (2)
    out_ref : (chunk_t*bp, output_p)  -- fc head, written once per chunk
    h_ref   : VMEM scratch (bp, hidden_p) -- hidden state carried across chunks
    """
    # Zero-init the carried hidden state on the first chunk (EI_CTRNN.init_hidden).
    @pl.when(pl.program_id(0) == 0)
    def _():
        h_ref[...] = jnp.zeros_like(h_ref)

    # (1) Batched input projection for ALL timesteps of this chunk, with the
    #     fused bias (b_in + b_h), written DIRECTLY into act_ref (reused as the
    #     xw buffer -- no separate scratch).
    act_ref[...] = (
        jnp.dot(x_ref[...], w_in_ref[...], preferred_element_type=jnp.float32)
        + b_pre_ref[...])

    w_h = w_h_ref[...]                       # hoisted out of the loop
    oneminusalpha = 1.0 - alpha

    # (2) Serial recurrence: one small MXU matmul per step on the critical path.
    #     act_ref[row] holds xw[t] on entry and is overwritten with h_new
    #     (read strictly before the write within each step).
    # TODO(synk): weight-stationary MXU driving (pltpu.matmul_push_rhs /
    # matmul_acc_lhs / matmul_pop) would avoid re-pushing W_h every timestep on
    # v5e; kept as jnp.dot here for robust lowering across generations.
    def step(t, h):
        row = pl.multiple_of(t * bp, bp)          # bp is a multiple of 8
        pre = act_ref[pl.ds(row, bp), :] + jnp.dot(
            h, w_h, preferred_element_type=jnp.float32)
        if alpha == 1.0:                          # static special-case (dt=None)
            h_new = jnp.maximum(pre, 0.0)
        else:
            h_new = jnp.maximum(h * oneminusalpha + pre * alpha, 0.0)
        act_ref[pl.ds(row, bp), :] = h_new
        return h_new

    h_final = lax.fori_loop(0, chunk_t, step, h_ref[...], unroll=unroll)
    h_ref[...] = h_final                          # carry hidden to the next chunk

    # (3) fc head for this chunk: one matmul, one lane-dense store.
    out_ref[...] = (
        jnp.dot(act_ref[...], w_fc_ref[...], preferred_element_type=jnp.float32)
        + b_fc_ref[...])


def rnn_net_forward(x, params, *, alpha=1.0, target_chunk_rows=512):
    """Pallas forward pass of RNNNet.

    x      : (seq_len, batch, input_size) float32
    params : dict with pre-transposed weights:
             w_in (I,H), b_in (1,H), w_h (H,H), b_h (1,H), w_fc (H,O), b_fc (1,O)
    """
    seq_len, batch, input_size = x.shape
    hidden_size = params["w_in"].shape[1]
    output_size = params["w_fc"].shape[1]

    # Hardware-friendly padding: sublane (8) on batch, lane (128) on features.
    bp = _round_up(batch, 8)
    ip = _round_up(input_size, 128)
    hp = _round_up(hidden_size, 128)
    op = _round_up(output_size, 128)

    # Time chunking: chunk_t timesteps (= chunk_t*bp padded rows) per grid step.
    chunk_t = max(1, min(seq_len, target_chunk_rows // bp))
    sp = _round_up(seq_len, chunk_t)          # trailing padded timesteps -> sliced off
    num_chunks = sp // chunk_t
    rows_per_chunk = chunk_t * bp

    x_p = _pad_to(x, {0: sp, 1: bp, 2: ip}).reshape(sp * bp, ip)
    w_in = _pad_to(params["w_in"], {0: ip, 1: hp})
    w_h = _pad_to(params["w_h"], {0: hp, 1: hp})
    w_fc = _pad_to(params["w_fc"], {0: hp, 1: op})
    b_pre = _pad_to(params["b_in"] + params["b_h"], {1: hp})   # fused bias
    b_fc = _pad_to(params["b_fc"], {1: op})

    unroll = int(min(chunk_t, 8))
    kernel = functools.partial(_rnn_chunk_kernel, chunk_t, bp, float(alpha), unroll)

    # VMEM budget: double-buffered chunk tiles + weights + carried h, with slack.
    chunk_bytes = rows_per_chunk * (ip + hp + op) * 4
    weight_bytes = (ip * hp + hp * hp + hp * op + hp + op) * 4
    needed = 2 * chunk_bytes + 2 * weight_bytes + bp * hp * 4 + (2 << 20)
    vmem_limit = int(min(48 << 20, max(32 << 20, needed)))     # 48 MiB cap (v7x-safe)

    out2d, act2d = pl.pallas_call(
        kernel,
        out_shape=(
            jax.ShapeDtypeStruct((sp * bp, op), jnp.float32),
            jax.ShapeDtypeStruct((sp * bp, hp), jnp.float32),
        ),
        grid_spec=pltpu.PrefetchScalarGridSpec(
            num_scalar_prefetch=0,
            grid=(num_chunks,),
            in_specs=[
                pl.BlockSpec((rows_per_chunk, ip), lambda c: (c, 0)),   # x chunk
                pl.BlockSpec((ip, hp), lambda c: (0, 0)),               # w_in
                pl.BlockSpec((1, hp), lambda c: (0, 0)),                # b_in + b_h
                pl.BlockSpec((hp, hp), lambda c: (0, 0)),               # w_h
                pl.BlockSpec((hp, op), lambda c: (0, 0)),               # w_fc
                pl.BlockSpec((1, op), lambda c: (0, 0)),                # b_fc
            ],
            out_specs=(
                pl.BlockSpec((rows_per_chunk, op), lambda c: (c, 0)),   # out chunk
                pl.BlockSpec((rows_per_chunk, hp), lambda c: (c, 0)),   # act chunk
            ),
            scratch_shapes=[pltpu.VMEM((bp, hp), jnp.float32)],          # carried h
        ),
        compiler_params=pltpu.CompilerParams(
            dimension_semantics=("arbitrary",),
            vmem_limit_bytes=vmem_limit),
    )(x_p, w_in, b_pre, w_h, w_fc, b_fc)

    out = out2d.reshape(sp, bp, op)[:seq_len, :batch, :output_size]
    act = act2d.reshape(sp, bp, hp)[:seq_len, :batch, :hidden_size]
    return out, act


def make_params(key, input_size, hidden_size, output_size, ei_ratio=0.8, mask=None):
    """Deterministically build RNNNet parameters, mimicking the __init__ logic:
       - nn.Linear uniform(-1/sqrt(fan_in), 1/sqrt(fan_in)) init,
       - optional element-wise mask on h2h weight,
       - EI sign constraint: row o of |W_h2h| scaled by hidden_sgns[o].
    """
    ks = jax.random.split(key, 8)

    def linear_init(kw, kb, fan_in, fan_out):
        bound = 1.0 / np.sqrt(fan_in)
        w = jax.random.uniform(kw, (fan_out, fan_in), jnp.float32, -bound, bound)
        b = jax.random.uniform(kb, (fan_out,), jnp.float32, -bound, bound)
        return w, b

    w_in, b_in = linear_init(ks[0], ks[1], input_size, hidden_size)    # (H, I)
    w_h, b_h = linear_init(ks[2], ks[3], hidden_size, hidden_size)     # (H, H)
    w_fc, b_fc = linear_init(ks[4], ks[5], hidden_size, output_size)   # (O, H)

    if mask is not None:
        w_h = w_h * mask

    # hidden_sgns = 2 * bernoulli(ei_ratio) - 1 ;  W' = (|W|.T * sgns).T
    sgns = 2.0 * jax.random.bernoulli(
        ks[6], ei_ratio, (hidden_size,)).astype(jnp.float32) - 1.0
    w_h = jnp.abs(w_h) * sgns[:, None]

    # Pre-transpose weights to (in, out) for the kernel; biases to (1, out).
    return {
        "w_in": w_in.T, "b_in": b_in[None, :],
        "w_h": w_h.T, "b_h": b_h[None, :],
        "w_fc": w_fc.T, "b_fc": b_fc[None, :],
    }


def rnn_net_reference(x, params, *, alpha=1.0):
    """Pure-JAX reference (mirrors the PyTorch forward) for validation."""
    oneminusalpha = 1.0 - alpha

    def step(h, x_t):
        pre = x_t @ params["w_in"] + params["b_in"] + h @ params["w_h"] + params["b_h"]
        h_new = jnp.maximum(h * oneminusalpha + pre * alpha, 0.0)
        return h_new, h_new

    h0 = jnp.zeros((x.shape[1], params["w_in"].shape[1]), jnp.float32)
    _, act = jax.lax.scan(step, h0, x)
    out = act @ params["w_fc"] + params["b_fc"]
    return out, act


if __name__ == "__main__":
    seq_len, batch = 8, 2
    input_size, hidden_size, output_size = 4, 32, 3

    key = jax.random.PRNGKey(0)
    k_x, k_p = jax.random.split(key)

    x = jax.random.normal(k_x, (seq_len, batch, input_size), jnp.float32)
    mask = jnp.ones((hidden_size, hidden_size), jnp.float32)  # RNNNet requires a mask arg
    params = make_params(k_p, input_size, hidden_size, output_size,
                         ei_ratio=0.8, mask=mask)

    # dt=None in the PyTorch module => alpha = 1.0
    out, act = rnn_net_forward(x, params, alpha=1.0)
    out = jax.block_until_ready(out)
    act = jax.block_until_ready(act)

    out_ref, act_ref = rnn_net_reference(x, params, alpha=1.0)
    np.testing.assert_allclose(np.asarray(out), np.asarray(out_ref), rtol=1e-5, atol=1e-5)
    np.testing.assert_allclose(np.asarray(act), np.asarray(act_ref), rtol=1e-5, atol=1e-5)

    print("KERNEL_OK")
</pallas_src>

<mosaic_0001>
module attributes {stable_mosaic.version = 11 : i64} {
  func.func @_rnn_chunk_kernel(%arg0: i32, %arg1: memref<64x128xf32, #tpu.memory_space<vmem>>, %arg2: memref<128x128xf32, #tpu.memory_space<vmem>>, %arg3: memref<1x128xf32, #tpu.memory_space<vmem>>, %arg4: memref<128x128xf32, #tpu.memory_space<vmem>>, %arg5: memref<128x128xf32, #tpu.memory_space<vmem>>, %arg6: memref<1x128xf32, #tpu.memory_space<vmem>>, %arg7: memref<64x128xf32, #tpu.memory_space<vmem>>, %arg8: memref<64x128xf32, #tpu.memory_space<vmem>>, %arg9: memref<8x128xf32, #tpu.memory_space<vmem>>) attributes {dimension_semantics = [#tpu.dimension_semantics<arbitrary>], iteration_bounds = array<i64: 1>, scalar_prefetch = 0 : i64, scratch_operands = 1 : i64, tpu.core_type = #tpu.core_type<tc>, window_params = [{transform_indices = @transform_0, window_bounds = array<i64: 64, 128>}, {pipeline_mode = #tpu.pipeline_mode<synchronous>, transform_indices = @transform_1, window_bounds = array<i64: 128, 128>}, {pipeline_mode = #tpu.pipeline_mode<synchronous>, transform_indices = @transform_2, window_bounds = array<i64: 1, 128>}, {pipeline_mode = #tpu.pipeline_mode<synchronous>, transform_indices = @transform_3, window_bounds = array<i64: 128, 128>}, {pipeline_mode = #tpu.pipeline_mode<synchronous>, transform_indices = @transform_4, window_bounds = array<i64: 128, 128>}, {pipeline_mode = #tpu.pipeline_mode<synchronous>, transform_indices = @transform_5, window_bounds = array<i64: 1, 128>}, {transform_indices = @transform_6, window_bounds = array<i64: 64, 128>}, {transform_indices = @transform_7, window_bounds = array<i64: 64, 128>}]} {
    %c0_i32 = arith.constant 0 : i32
    %0 = arith.cmpi eq, %arg0, %c0_i32 : i32
    %1 = arith.extui %0 : i1 to i32
    %c0_i32_0 = arith.constant 0 : i32
    %2 = arith.cmpi ne, %1, %c0_i32_0 : i32
    scf.if %2 {
      %cst_64 = arith.constant 0.000000e+00 : f32
      %100 = vector.broadcast %cst_64 : f32 to vector<8x128xf32>
      %c0_65 = arith.constant 0 : index
      %c0_66 = arith.constant 0 : index
      %101 = vector.load %arg9[%c0_65, %c0_66] : memref<8x128xf32, #tpu.memory_space<vmem>>, vector<8x128xf32>
      tpu.vector_store %arg9[%c0_65, %c0_66], %100 {strides = array<i32>} : memref<8x128xf32, #tpu.memory_space<vmem>>, vector<8x128xf32>,
    } else {
    }
    %c0 = arith.constant 0 : index
    %c0_1 = arith.constant 0 : index
    %3 = vector.load %arg1[%c0, %c0_1] : memref<64x128xf32, #tpu.memory_space<vmem>>, vector<64x128xf32>
    %c0_2 = arith.constant 0 : index
    %c0_3 = arith.constant 0 : index
    %4 = vector.load %arg2[%c0_2, %c0_3] : memref<128x128xf32, #tpu.memory_space<vmem>>, vector<128x128xf32>
    %cst = arith.constant dense<0.000000e+00> : vector<64x128xf32>
    %5 = tpu.matmul %3, %4, %cst {dimension_numbers = #tpu.dot_dimension_numbers<[1], [0], [0], [1], [0, 0, 1, 1], [], []>} : vector<64x128xf32>, vector<128x128xf32>, vector<64x128xf32> -> vector<64x128xf32>
    %c0_4 = arith.constant 0 : index
    %c0_5 = arith.constant 0 : index
    %6 = vector.load %arg3[%c0_4, %c0_5] : memref<1x128xf32, #tpu.memory_space<vmem>>, vector<1x128xf32>
    %7 = vector.broadcast %6 : vector<1x128xf32> to vector<64x128xf32>
    %8 = arith.addf %5, %7 : vector<64x128xf32>
    %c0_6 = arith.constant 0 : index
    %c0_7 = arith.constant 0 : index
    %9 = vector.load %arg8[%c0_6, %c0_7] : memref<64x128xf32, #tpu.memory_space<vmem>>, vector<64x128xf32>
    tpu.vector_store %arg8[%c0_6, %c0_7], %8 {strides = array<i32>} : memref<64x128xf32, #tpu.memory_space<vmem>>, vector<64x128xf32>,
    %c0_8 = arith.constant 0 : index
    %c0_9 = arith.constant 0 : index
    %10 = vector.load %arg4[%c0_8, %c0_9] : memref<128x128xf32, #tpu.memory_space<vmem>>, vector<128x128xf32>
    %c0_10 = arith.constant 0 : index
    %c0_11 = arith.constant 0 : index
    %11 = vector.load %arg9[%c0_10, %c0_11] : memref<8x128xf32, #tpu.memory_space<vmem>>, vector<8x128xf32>
    %c0_i32_12 = arith.constant 0 : i32
    %c8_i32 = arith.constant 8 : i32
    %12 = arith.muli %c0_i32_12, %c8_i32 : i32
    %13 = tpu.assume_multiple %12, 8 : i32
    %14 = arith.index_cast %13 : i32 to index
    %c0_13 = arith.constant 0 : index
    %15 = vector.load %arg8[%14, %c0_13] : memref<64x128xf32, #tpu.memory_space<vmem>>, vector<8x128xf32>
    %cst_14 = arith.constant dense<0.000000e+00> : vector<8x128xf32>
    %16 = tpu.matmul %11, %10, %cst_14 {dimension_numbers = #tpu.dot_dimension_numbers<[1], [0], [0], [1], [0, 0, 1, 1], [], []>} : vector<8x128xf32>, vector<128x128xf32>, vector<8x128xf32> -> vector<8x128xf32>
    %17 = arith.addf %15, %16 : vector<8x128xf32>
    %cst_15 = arith.constant 0.000000e+00 : f32
    %18 = vector.broadcast %cst_15 : f32 to vector<8x128xf32>
    %19 = arith.maximumf %17, %18 : vector<8x128xf32>
    %20 = arith.index_cast %13 : i32 to index
    %c0_16 = arith.constant 0 : index
    %21 = vector.load %arg8[%20, %c0_16] : memref<64x128xf32, #tpu.memory_space<vmem>>, vector<8x128xf32>
    tpu.vector_store %arg8[%20, %c0_16], %19 {strides = array<i32>} : memref<64x128xf32, #tpu.memory_space<vmem>>, vector<8x128xf32>,
    %c1_i32 = arith.constant 1 : i32
    %c8_i32_17 = arith.constant 8 : i32
    %22 = arith.muli %c1_i32, %c8_i32_17 : i32
    %23 = tpu.assume_multiple %22, 8 : i32
    %24 = arith.index_cast %23 : i32 to index
    %c0_18 = arith.constant 0 : index
    %25 = vector.load %arg8[%24, %c0_18] : memref<64x128xf32, #tpu.memory_space<vmem>>, vector<8x128xf32>
    %cst_19 = arith.constant dense<0.000000e+00> : vector<8x128xf32>
    %26 = tpu.matmul %19, %10, %cst_19 {dimension_numbers = #tpu.dot_dimension_numbers<[1], [0], [0], [1], [0, 0, 1, 1], [], []>} : vector<8x128xf32>, vector<128x128xf32>, vector<8x128xf32> -> vector<8x128xf32>
    %27 = arith.addf %25, %26 : vector<8x128xf32>
    %cst_20 = arith.constant 0.000000e+00 : f32
    %28 = vector.broadcast %cst_20 : f32 to vector<8x128xf32>
    %29 = arith.maximumf %27, %28 : vector<8x128xf32>
    %30 = arith.index_cast %23 : i32 to index
    %c0_21 = arith.constant 0 : index
    %31 = vector.load %arg8[%30, %c0_21] : memref<64x128xf32, #tpu.memory_space<vmem>>, vector<8x128xf32>
    tpu.vector_store %arg8[%30, %c0_21], %29 {strides = array<i32>} : memref<64x128xf32, #tpu.memory_space<vmem>>, vector<8x128xf32>,
    %c2_i32 = arith.constant 2 : i32
    %c8_i32_22 = arith.constant 8 : i32
    %32 = arith.muli %c2_i32, %c8_i32_22 : i32
    %33 = tpu.assume_multiple %32, 8 : i32
    %34 = arith.index_cast %33 : i32 to index
    %c0_23 = arith.constant 0 : index
    %35 = vector.load %arg8[%34, %c0_23] : memref<64x128xf32, #tpu.memory_space<vmem>>, vector<8x128xf32>
    %cst_24 = arith.constant dense<0.000000e+00> : vector<8x128xf32>
    %36 = tpu.matmul %29, %10, %cst_24 {dimension_numbers = #tpu.dot_dimension_numbers<[1], [0], [0], [1], [0, 0, 1, 1], [], []>} : vector<8x128xf32>, vector<128x128xf32>, vector<8x128xf32> -> vector<8x128xf32>
    %37 = arith.addf %35, %36 : vector<8x128xf32>
    %cst_25 = arith.constant 0.000000e+00 : f32
    %38 = vector.broadcast %cst_25 : f32 to vector<8x128xf32>
    %39 = arith.maximumf %37, %38 : vector<8x128xf32>
    %40 = arith.index_cast %33 : i32 to index
    %c0_26 = arith.constant 0 : index
    %41 = vector.load %arg8[%40, %c0_26] : memref<64x128xf32, #tpu.memory_space<vmem>>, vector<8x128xf32>
    tpu.vector_store %arg8[%40, %c0_26], %39 {strides = array<i32>} : memref<64x128xf32, #tpu.memory_space<vmem>>, vector<8x128xf32>,
    %c3_i32 = arith.constant 3 : i32
    %c8_i32_27 = arith.constant 8 : i32
    %42 = arith.muli %c3_i32, %c8_i32_27 : i32
    %43 = tpu.assume_multiple %42, 8 : i32
    %44 = arith.index_cast %43 : i32 to index
    %c0_28 = arith.constant 0 : index
    %45 = vector.load %arg8[%44, %c0_28] : memref<64x128xf32, #tpu.memory_space<vmem>>, vector<8x128xf32>
    %cst_29 = arith.constant dense<0.000000e+00> : vector<8x128xf32>
    %46 = tpu.matmul %39, %10, %cst_29 {dimension_numbers = #tpu.dot_dimension_numbers<[1], [0], [0], [1], [0, 0, 1, 1], [], []>} : vector<8x128xf32>, vector<128x128xf32>, vector<8x128xf32> -> vector<8x128xf32>
    %47 = arith.addf %45, %46 : vector<8x128xf32>
    %cst_30 = arith.constant 0.000000e+00 : f32
    %48 = vector.broadcast %cst_30 : f32 to vector<8x128xf32>
    %49 = arith.maximumf %47, %48 : vector<8x128xf32>
    %50 = arith.index_cast %43 : i32 to index
    %c0_31 = arith.constant 0 : index
    %51 = vector.load %arg8[%50, %c0_31] : memref<64x128xf32, #tpu.memory_space<vmem>>, vector<8x128xf32>
    tpu.vector_store %arg8[%50, %c0_31], %49 {strides = array<i32>} : memref<64x128xf32, #tpu.memory_space<vmem>>, vector<8x128xf32>,
    %c4_i32 = arith.constant 4 : i32
    %c8_i32_32 = arith.constant 8 : i32
    %52 = arith.muli %c4_i32, %c8_i32_32 : i32
    %53 = tpu.assume_multiple %52, 8 : i32
    %54 = arith.index_cast %53 : i32 to index
    %c0_33 = arith.constant 0 : index
    %55 = vector.load %arg8[%54, %c0_33] : memref<64x128xf32, #tpu.memory_space<vmem>>, vector<8x128xf32>
    %cst_34 = arith.constant dense<0.000000e+00> : vector<8x128xf32>
    %56 = tpu.matmul %49, %10, %cst_34 {dimension_numbers = #tpu.dot_dimension_numbers<[1], [0], [0], [1], [0, 0, 1, 1], [], []>} : vector<8x128xf32>, vector<128x128xf32>, vector<8x128xf32> -> vector<8x128xf32>
    %57 = arith.addf %55, %56 : vector<8x128xf32>
    %cst_35 = arith.constant 0.000000e+00 : f32
    %58 = vector.broadcast %cst_35 : f32 to vector<8x128xf32>
    %59 = arith.maximumf %57, %58 : vector<8x128xf32>
    %60 = arith.index_cast %53 : i32 to index
    %c0_36 = arith.constant 0 : index
    %61 = vector.load %arg8[%60, %c0_36] : memref<64x128xf32, #tpu.memory_space<vmem>>, vector<8x128xf32>
    tpu.vector_store %arg8[%60, %c0_36], %59 {strides = array<i32>} : memref<64x128xf32, #tpu.memory_space<vmem>>, vector<8x128xf32>,
    %c5_i32 = arith.constant 5 : i32
    %c8_i32_37 = arith.constant 8 : i32
    %62 = arith.muli %c5_i32, %c8_i32_37 : i32
    %63 = tpu.assume_multiple %62, 8 : i32
    %64 = arith.index_cast %63 : i32 to index
    %c0_38 = arith.constant 0 : index
    %65 = vector.load %arg8[%64, %c0_38] : memref<64x128xf32, #tpu.memory_space<vmem>>, vector<8x128xf32>
    %cst_39 = arith.constant dense<0.000000e+00> : vector<8x128xf32>
    %66 = tpu.matmul %59, %10, %cst_39 {dimension_numbers = #tpu.dot_dimension_numbers<[1], [0], [0], [1], [0, 0, 1, 1], [], []>} : vector<8x128xf32>, vector<128x128xf32>, vector<8x128xf32> -> vector<8x128xf32>
    %67 = arith.addf %65, %66 : vector<8x128xf32>
    %cst_40 = arith.constant 0.000000e+00 : f32
    %68 = vector.broadcast %cst_40 : f32 to vector<8x128xf32>
    %69 = arith.maximumf %67, %68 : vector<8x128xf32>
    %70 = arith.index_cast %63 : i32 to index
    %c0_41 = arith.constant 0 : index
    %71 = vector.load %arg8[%70, %c0_41] : memref<64x128xf32, #tpu.memory_space<vmem>>, vector<8x128xf32>
    tpu.vector_store %arg8[%70, %c0_41], %69 {strides = array<i32>} : memref<64x128xf32, #tpu.memory_space<vmem>>, vector<8x128xf32>,
    %c6_i32 = arith.constant 6 : i32
    %c8_i32_42 = arith.constant 8 : i32
    %72 = arith.muli %c6_i32, %c8_i32_42 : i32
    %73 = tpu.assume_multiple %72, 8 : i32
    %74 = arith.index_cast %73 : i32 to index
    %c0_43 = arith.constant 0 : index
    %75 = vector.load %arg8[%74, %c0_43] : memref<64x128xf32, #tpu.memory_space<vmem>>, vector<8x128xf32>
    %cst_44 = arith.constant dense<0.000000e+00> : vector<8x128xf32>
    %76 = tpu.matmul %69, %10, %cst_44 {dimension_numbers = #tpu.dot_dimension_numbers<[1], [0], [0], [1], [0, 0, 1, 1], [], []>} : vector<8x128xf32>, vector<128x128xf32>, vector<8x128xf32> -> vector<8x128xf32>
    %77 = arith.addf %75, %76 : vector<8x128xf32>
    %cst_45 = arith.constant 0.000000e+00 : f32
    %78 = vector.broadcast %cst_45 : f32 to vector<8x128xf32>
    %79 = arith.maximumf %77, %78 : vector<8x128xf32>
    %80 = arith.index_cast %73 : i32 to index
    %c0_46 = arith.constant 0 : index
    %81 = vector.load %arg8[%80, %c0_46] : memref<64x128xf32, #tpu.memory_space<vmem>>, vector<8x128xf32>
    tpu.vector_store %arg8[%80, %c0_46], %79 {strides = array<i32>} : memref<64x128xf32, #tpu.memory_space<vmem>>, vector<8x128xf32>,
    %c7_i32 = arith.constant 7 : i32
    %c8_i32_47 = arith.constant 8 : i32
    %82 = arith.muli %c7_i32, %c8_i32_47 : i32
    %83 = tpu.assume_multiple %82, 8 : i32
    %84 = arith.index_cast %83 : i32 to index
    %c0_48 = arith.constant 0 : index
    %85 = vector.load %arg8[%84, %c0_48] : memref<64x128xf32, #tpu.memory_space<vmem>>, vector<8x128xf32>
    %cst_49 = arith.constant dense<0.000000e+00> : vector<8x128xf32>
    %86 = tpu.matmul %79, %10, %cst_49 {dimension_numbers = #tpu.dot_dimension_numbers<[1], [0], [0], [1], [0, 0, 1, 1], [], []>} : vector<8x128xf32>, vector<128x128xf32>, vector<8x128xf32> -> vector<8x128xf32>
    %87 = arith.addf %85, %86 : vector<8x128xf32>
    %cst_50 = arith.constant 0.000000e+00 : f32
    %88 = vector.broadcast %cst_50 : f32 to vector<8x128xf32>
    %89 = arith.maximumf %87, %88 : vector<8x128xf32>
    %90 = arith.index_cast %83 : i32 to index
    %c0_51 = arith.constant 0 : index
    %91 = vector.load %arg8[%90, %c0_51] : memref<64x128xf32, #tpu.memory_space<vmem>>, vector<8x128xf32>
    tpu.vector_store %arg8[%90, %c0_51], %89 {strides = array<i32>} : memref<64x128xf32, #tpu.memory_space<vmem>>, vector<8x128xf32>,
    %c8_i32_52 = arith.constant 8 : i32
    %c0_53 = arith.constant 0 : index
    %c0_54 = arith.constant 0 : index
    %92 = vector.load %arg9[%c0_53, %c0_54] : memref<8x128xf32, #tpu.memory_space<vmem>>, vector<8x128xf32>
    tpu.vector_store %arg9[%c0_53, %c0_54], %89 {strides = array<i32>} : memref<8x128xf32, #tpu.memory_space<vmem>>, vector<8x128xf32>,
    %c0_55 = arith.constant 0 : index
    %c0_56 = arith.constant 0 : index
    %93 = vector.load %arg8[%c0_55, %c0_56] : memref<64x128xf32, #tpu.memory_space<vmem>>, vector<64x128xf32>
    %c0_57 = arith.constant 0 : index
    %c0_58 = arith.constant 0 : index
    %94 = vector.load %arg5[%c0_57, %c0_58] : memref<128x128xf32, #tpu.memory_space<vmem>>, vector<128x128xf32>
    %cst_59 = arith.constant dense<0.000000e+00> : vector<64x128xf32>
    %95 = tpu.matmul %93, %94, %cst_59 {dimension_numbers = #tpu.dot_dimension_numbers<[1], [0], [0], [1], [0, 0, 1, 1], [], []>} : vector<64x128xf32>, vector<128x128xf32>, vector<64x128xf32> -> vector<64x128xf32>
    %c0_60 = arith.constant 0 : index
    %c0_61 = arith.constant 0 : index
    %96 = vector.load %arg6[%c0_60, %c0_61] : memref<1x128xf32, #tpu.memory_space<vmem>>, vector<1x128xf32>
    %97 = vector.broadcast %96 : vector<1x128xf32> to vector<64x128xf32>
    %98 = arith.addf %95, %97 : vector<64x128xf32>
    %c0_62 = arith.constant 0 : index
    %c0_63 = arith.constant 0 : index
    %99 = vector.load %arg7[%c0_62, %c0_63] : memref<64x128xf32, #tpu.memory_space<vmem>>, vector<64x128xf32>
    tpu.vector_store %arg7[%c0_62, %c0_63], %98 {strides = array<i32>} : memref<64x128xf32, #tpu.memory_space<vmem>>, vector<64x128xf32>,
    return
  }
  func.func @transform_0(%arg0: i32) -> (i32, i32) {
    %c0_i32 = arith.constant 0 : i32
    %c0_i32_0 = arith.constant 0 : i32
    return %arg0, %c0_i32 : i32, i32
  }
  func.func @transform_1(%arg0: i32) -> (i32, i32) {
    %c0_i32 = arith.constant 0 : i32
    %c0_i32_0 = arith.constant 0 : i32
    %c0_i32_1 = arith.constant 0 : i32
    return %c0_i32, %c0_i32_0 : i32, i32
  }
  func.func @transform_2(%arg0: i32) -> (i32, i32) {
    %c0_i32 = arith.constant 0 : i32
    %c0_i32_0 = arith.constant 0 : i32
    %c0_i32_1 = arith.constant 0 : i32
    return %c0_i32, %c0_i32_0 : i32, i32
  }
  func.func @transform_3(%arg0: i32) -> (i32, i32) {
    %c0_i32 = arith.constant 0 : i32
    %c0_i32_0 = arith.constant 0 : i32
    %c0_i32_1 = arith.constant 0 : i32
    return %c0_i32, %c0_i32_0 : i32, i32
  }
  func.func @transform_4(%arg0: i32) -> (i32, i32) {
    %c0_i32 = arith.constant 0 : i32
    %c0_i32_0 = arith.constant 0 : i32
    %c0_i32_1 = arith.constant 0 : i32
    return %c0_i32, %c0_i32_0 : i32, i32
  }
  func.func @transform_5(%arg0: i32) -> (i32, i32) {
    %c0_i32 = arith.constant 0 : i32
    %c0_i32_0 = arith.constant 0 : i32
    %c0_i32_1 = arith.constant 0 : i32
    return %c0_i32, %c0_i32_0 : i32, i32
  }
  func.func @transform_6(%arg0: i32) -> (i32, i32) {
    %c0_i32 = arith.constant 0 : i32
    %c0_i32_0 = arith.constant 0 : i32
    return %arg0, %c0_i32 : i32, i32
  }
  func.func @transform_7(%arg0: i32) -> (i32, i32) {
    %c0_i32 = arith.constant 0 : i32
    %c0_i32_0 = arith.constant 0 : i32
    return %arg0, %c0_i32 : i32, i32
  }
}

</mosaic_0001>

<llo_original>
// kernel: tpu_custom_call.1
$region0: #{tpu_custom_call.1}
  #allocation0 [shape = 'u32[]', space=smem, size = 0x4, offset = 0x4, fixed_abs, tag = 'smem constant byte address 0x4 - core index']
  #allocation1 [shape = 'u32[144,128]{1,0:T(1,128)}', space=vmem, size = 0x12000, scoped, tag = 'internal scratch']
  #allocation2 [shape = 'f32[8,128]{1,0:T(8,128)}', space=vmem, size = 0x1000, scoped, tag = 'scratch operand']
  %s0 = inlined_call_operand.hbm [shape: f32[64,128], index: 0, kind: input, shape index: {}]
  %s1 = inlined_call_operand.hbm [shape: f32[128,128], index: 1, kind: input, shape index: {}]
  %s2 = inlined_call_operand.vmem [shape: f32[1,128], index: 2, kind: input, shape index: {}]
  %s3 = inlined_call_operand.hbm [shape: f32[128,128], index: 3, kind: input, shape index: {}]
  %s4 = inlined_call_operand.hbm [shape: f32[128,128], index: 4, kind: input, shape index: {}]
  %s5 = inlined_call_operand.vmem [shape: f32[1,128], index: 5, kind: input, shape index: {}]
  %s6 = inlined_call_operand.hbm [shape: f32[64,128], index: 6, kind: output, shape index: {0}]
  %s7 = inlined_call_operand.hbm [shape: f32[64,128], index: 7, kind: output, shape index: {1}]
  %8 = xla_tuple %s6, %s7
  %s9 = sld [smem:[#allocation0]]
  $region62: #{tpu_custom_call.1} parent=0
    _
  %s11 = ssub.s32 1, %s9
  %s12 = scalar_select 0, %s11, %s9
  $region1: #{tpu_custom_call.1} parent=0
    #allocation3 [shape = 'u8[32768]{0}', space=vmem, size = 0x8000, scoped, tag = 'input window, operand 0, single buffered']
    #allocation4 [shape = 's32[1]{0}', space=sflag, size = 0x4, scoped, tag = 'scoped memory for tpu_custom_call.1']
    #allocation5 [shape = 's32[1]{0}', space=sflag, size = 0x4, scoped, tag = 'scoped memory for tpu_custom_call.1']
    #allocation6 [shape = 'u8[65536]{0}', space=vmem, size = 0x10000, scoped, tag = 'input window, operand 1, single buffered']
    #allocation7 [shape = 's32[1]{0}', space=sflag, size = 0x4, scoped, tag = 'scoped memory for tpu_custom_call.1']
    #allocation8 [shape = 'u8[65536]{0}', space=vmem, size = 0x10000, scoped, tag = 'input window, operand 3, single buffered']
    #allocation9 [shape = 'u8[65536]{0}', space=vmem, size = 0x10000, scoped, tag = 'input window, operand 4, single buffered']
    #allocation10 [shape = 's32[1]{0}', space=sflag, size = 0x4, scoped, tag = 'scoped memory for tpu_custom_call.1']
    #allocation11 [shape = 'u8[32768]{0}', space=vmem, size = 0x8000, scoped, tag = 'output window, operand 0, single buffered']
    #allocation12 [shape = 'u8[32768]{0}', space=vmem, size = 0x8000, scoped, tag = 'output window, operand 1, single buffered']
    #allocation13 [shape = 's32[1]{0}', space=sflag, size = 0x4, scoped, tag = 'scoped memory for tpu_custom_call.1']
    %13 = vsyncpa [#allocation4], 0
    %14 = vsyncpa [#allocation7], 0
    %15 = vsyncpa [#allocation10], 0
    %16 = vsyncpa [#allocation5], 0
    %17 = vsyncpa [#allocation13], 0
    // Predicated region
    $region2: #{tpu_custom_call.1} parent=1 // pred_check
      _
    $region3: #{tpu_custom_call.1} parent=1 // pred_check_branch
      %19 = sbr.rel (0) target = $region5
    $region4: #{tpu_custom_call.1} parent=1 // pred_region
      %s21 = ssub.s32 1024, 1024
      %22 = vsyncadd [#allocation4], %s21
      %s23 = sshll.u32 [#allocation3], 4
      %s24 = int_to_ptr.vmem [resolvable:$true] %s23
      %29 = dma.hbm_to_vmem [thread:$0]  %s0, 1024, %s24, [#allocation4], 128, 128, 8
    $region5: #{tpu_custom_call.1} parent=1 // pred_fallthru
      _
    // Predicated region
    $region6: #{tpu_custom_call.1} parent=1 // pred_check
      _
    $region7: #{tpu_custom_call.1} parent=1 // pred_check_branch
      %31 = sbr.rel (0) target = $region9
    $region8: #{tpu_custom_call.1} parent=1 // pred_region
      %s33 = ssub.s32 2048, 2048
      %34 = vsyncadd [#allocation7], %s33
      %s35 = sshll.u32 [#allocation6], 4
      %s36 = int_to_ptr.vmem [resolvable:$true] %s35
      %41 = dma.hbm_to_vmem [thread:$0]  %s1, 2048, %s36, [#allocation7], 128, 128, 8
    $region9: #{tpu_custom_call.1} parent=1 // pred_fallthru
      _
    // Predicated region
    $region10: #{tpu_custom_call.1} parent=1 // pred_check
      _
    $region11: #{tpu_custom_call.1} parent=1 // pred_check_branch
      %43 = sbr.rel (0) target = $region13
    $region12: #{tpu_custom_call.1} parent=1 // pred_region
      _
    $region13: #{tpu_custom_call.1} parent=1 // pred_fallthru
      _
    // Predicated region
    $region14: #{tpu_custom_call.1} parent=1 // pred_check
      _
    $region15: #{tpu_custom_call.1} parent=1 // pred_check_branch
      %45 = sbr.rel (0) target = $region17
    $region16: #{tpu_custom_call.1} parent=1 // pred_region
      %s47 = ssub.s32 2048, 2048
      %48 = vsyncadd [#allocation7], %s47
      %s49 = sshll.u32 [#allocation8], 4
      %s50 = int_to_ptr.vmem [resolvable:$true] %s49
      %55 = dma.hbm_to_vmem [thread:$0]  %s3, 2048, %s50, [#allocation7], 128, 128, 8
    $region17: #{tpu_custom_call.1} parent=1 // pred_fallthru
      _
    // Predicated region
    $region18: #{tpu_custom_call.1} parent=1 // pred_check
      _
    $region19: #{tpu_custom_call.1} parent=1 // pred_check_branch
      %57 = sbr.rel (0) target = $region21
    $region20: #{tpu_custom_call.1} parent=1 // pred_region
      %s59 = ssub.s32 2048, 2048
      %60 = vsyncadd [#allocation10], %s59
      %s61 = sshll.u32 [#allocation9], 4
      %s62 = int_to_ptr.vmem [resolvable:$true] %s61
      %67 = dma.hbm_to_vmem [thread:$0]  %s4, 2048, %s62, [#allocation10], 128, 128, 8
    $region21: #{tpu_custom_call.1} parent=1 // pred_fallthru
      _
    // Predicated region
    $region22: #{tpu_custom_call.1} parent=1 // pred_check
      _
    $region23: #{tpu_custom_call.1} parent=1 // pred_check_branch
      %69 = sbr.rel (0) target = $region25
    $region24: #{tpu_custom_call.1} parent=1 // pred_region
      _
    $region25: #{tpu_custom_call.1} parent=1 // pred_fallthru
      _
    // Predicated region
    $region26: #{tpu_custom_call.1} parent=1 // pred_check
      _
    $region27: #{tpu_custom_call.1} parent=1 // pred_check_branch
      %71 = sbr.rel (0) target = $region29
    $region28: #{tpu_custom_call.1} parent=1 // pred_region
      %72 = dma.done [#allocation4], 1024
    $region29: #{tpu_custom_call.1} parent=1 // pred_fallthru
      _
    // Predicated region
    $region30: #{tpu_custom_call.1} parent=1 // pred_check
      _
    $region31: #{tpu_custom_call.1} parent=1 // pred_check_branch
      %74 = sbr.rel (0) target = $region33
    $region32: #{tpu_custom_call.1} parent=1 // pred_region
      %75 = dma.done [#allocation7], 2048
    $region33: #{tpu_custom_call.1} parent=1 // pred_fallthru
      _
    // Predicated region
    $region34: #{tpu_custom_call.1} parent=1 // pred_check
      _
    $region35: #{tpu_custom_call.1} parent=1 // pred_check_branch
      %77 = sbr.rel (0) target = $region37
    $region36: #{tpu_custom_call.1} parent=1 // pred_region
      %78 = dma.done [#allocation7], 2048
    $region37: #{tpu_custom_call.1} parent=1 // pred_fallthru
      _
    // Predicated region
    $region38: #{tpu_custom_call.1} parent=1 // pred_check
      _
    $region39: #{tpu_custom_call.1} parent=1 // pred_check_branch
      %80 = sbr.rel (0) target = $region41
    $region40: #{tpu_custom_call.1} parent=1 // pred_region
      %81 = dma.done [#allocation10], 2048
    $region41: #{tpu_custom_call.1} parent=1 // pred_fallthru
      _
    %p82 = scmp.eq.s32.totalorder 0, 0
    // Predicated region
    $region42: #{tpu_custom_call.1} parent=1 // pred_check
      %p83 = pneg %p82
    $region43: #{tpu_custom_call.1} parent=1 // pred_check_branch
      %85 = sbr.rel (%p83) target = $region45
    $region44: #{tpu_custom_call.1} parent=1 // pred_region
      %86 = vst [vmem:[#allocation2] sm:$0xff] 0.0
    $region45: #{tpu_custom_call.1} parent=1 // pred_fallthru
      _
    %v87 = vld [vmem:[#allocation3] sm:$0xff]
    %v88 = vld [vmem:[#allocation3 + $0x8] sm:$0xff]
    %v89 = vld [vmem:[#allocation3 + $0x10] sm:$0xff]
    %v90 = vld [vmem:[#allocation3 + $0x18] sm:$0xff]
    %v91 = vld [vmem:[#allocation3 + $0x20] sm:$0xff]
    %v92 = vld [vmem:[#allocation3 + $0x28] sm:$0xff]
    %v93 = vld [vmem:[#allocation3 + $0x30] sm:$0xff]
    %v94 = vld [vmem:[#allocation3 + $0x38] sm:$0xff]
    %v95 = vld [vmem:[#allocation6] sm:$0xff]
    %v96 = vld [vmem:[#allocation6 + $0x8] sm:$0xff]
    %v97 = vld [vmem:[#allocation6 + $0x10] sm:$0xff]
    %v98 = vld [vmem:[#allocation6 + $0x18] sm:$0xff]
    %v99 = vld [vmem:[#allocation6 + $0x20] sm:$0xff]
    %v100 = vld [vmem:[#allocation6 + $0x28] sm:$0xff]
    %v101 = vld [vmem:[#allocation6 + $0x30] sm:$0xff]
    %v102 = vld [vmem:[#allocation6 + $0x38] sm:$0xff]
    %v103 = vld [vmem:[#allocation6 + $0x40] sm:$0xff]
    %v104 = vld [vmem:[#allocation6 + $0x48] sm:$0xff]
    %v105 = vld [vmem:[#allocation6 + $0x50] sm:$0xff]
    %v106 = vld [vmem:[#allocation6 + $0x58] sm:$0xff]
    %v107 = vld [vmem:[#allocation6 + $0x60] sm:$0xff]
    %v108 = vld [vmem:[#allocation6 + $0x68] sm:$0xff]
    %v109 = vld [vmem:[#allocation6 + $0x70] sm:$0xff]
    %v110 = vld [vmem:[#allocation6 + $0x78] sm:$0xff]
    %v111 = vld [vmem:[%s2] sm:$0x1]
    %v113 = vlaneseq
    %v114 = vshrl.u32 %v113, 7
    %v115 = vsub.s32 0, %v114
    %v116 = vrot.slane %v111, %v115
    %118 = vmatprep.subr.mxu0 0.0
    %119 = vmatpush1.msra.mxu0 %v95
    %120 = vmatprep.subr.mxu0 0.0
    %121 = vmatpush1.msra.mxu0 %v96
    %122 = vmatprep.subr.mxu0 0.0
    %123 = vmatpush1.msra.mxu0 %v97
    %124 = vmatprep.subr.mxu0 0.0
    %125 = vmatpush1.msra.mxu0 %v98
    %126 = vmatprep.subr.mxu0 0.0
    %127 = vmatpush1.msra.mxu0 %v99
    %128 = vmatprep.subr.mxu0 0.0
    %129 = vmatpush1.msra.mxu0 %v100
    %130 = vmatprep.subr.mxu0 0.0
    %131 = vmatpush1.msra.mxu0 %v101
    %132 = vmatprep.subr.mxu0 0.0
    %133 = vmatpush1.msra.mxu0 %v102
    %134 = vmatprep.subr.mxu0 0.0
    %135 = vmatpush1.msra.mxu0 %v103
    %136 = vmatprep.subr.mxu0 0.0
    %137 = vmatpush1.msra.mxu0 %v104
    %138 = vmatprep.subr.mxu0 0.0
    %139 = vmatpush1.msra.mxu0 %v105
    %140 = vmatprep.subr.mxu0 0.0
    %141 = vmatpush1.msra.mxu0 %v106
    %142 = vmatprep.subr.mxu0 0.0
    %143 = vmatpush1.msra.mxu0 %v107
    %144 = vmatprep.subr.mxu0 0.0
    %145 = vmatpush1.msra.mxu0 %v108
    %146 = vmatprep.subr.mxu0 0.0
    %147 = vmatpush1.msra.mxu0 %v109
    %148 = vmatprep.subr.mxu0 0.0
    %149 = vmatpush1.msra.mxu0 %v110
    %150 = vmatprep.subr.mxu0 0.0
    %151 = vmatpush1.msra.mxu0 0.0
    %152 = vmatprep.subr.mxu0 0.0
    %153 = vmatpush1.msra.mxu0 0.0
    %154 = vmatprep.subr.mxu0 0.0
    %155 = vmatpush1.msra.mxu0 0.0
    %156 = vmatprep.subr.mxu0 0.0
    %157 = vmatpush1.msra.mxu0 0.0
    %158 = vmatprep.subr.mxu0 0.0
    %159 = vmatpush1.msra.mxu0 0.0
    %160 = vmatprep.subr.mxu0 0.0
    %161 = vmatpush1.msra.mxu0 0.0
    %162 = vmatprep.subr.mxu0 0.0
    %163 = vmatpush1.msra.mxu0 0.0
    %164 = vmatprep.subr.mxu0 0.0
    %165 = vmatpush1.msra.mxu0 0.0
    %166 = vmatprep.subr.mxu0 0.0
    %167 = vmatpush1.msra.mxu0 0.0
    %168 = vmatprep.subr.mxu0 0.0
    %169 = vmatpush1.msra.mxu0 0.0
    %170 = vmatprep.subr.mxu0 0.0
    %171 = vmatpush1.msra.mxu0 0.0
    %172 = vmatprep.subr.mxu0 0.0
    %173 = vmatpush1.msra.mxu0 0.0
    %174 = vmatprep.subr.mxu0 0.0
    %175 = vmatpush1.msra.mxu0 0.0
    %176 = vmatprep.subr.mxu0 0.0
    %177 = vmatpush1.msra.mxu0 0.0
    %178 = vmatprep.subr.mxu0 0.0
    %179 = vmatpush1.msra.mxu0 0.0
    %180 = vmatprep.subr.mxu0 0.0
    %181 = vmatpush1.msra.mxu0 0.0
    %182 = vmatprep.mubr.f32.mxu0 0.0
    %183 = vmatmul.mubr.f32.gmra.mrb[0].mxu0 %v87
    %v184 = vpop.f32.mrb[0].mxu0
    %v185 = vadd.f32 %v116, %v184
    %v186 = vpop.f32.mrb[0].mxu0
    %187 = vmatprep.mubr.f32.mxu0 0.0
    %188 = vmatmul.mubr.f32.gmra.mrb[0].mxu0 %v88
    %v189 = vpop.f32.mrb[0].mxu0
    %v190 = vadd.f32 %v116, %v189
    %v191 = vpop.f32.mrb[0].mxu0
    %192 = vmatprep.mubr.f32.mxu0 0.0
    %193 = vmatmul.mubr.f32.gmra.mrb[0].mxu0 %v89
    %v194 = vpop.f32.mrb[0].mxu0
    %v195 = vadd.f32 %v116, %v194
    %v196 = vpop.f32.mrb[0].mxu0
    %197 = vmatprep.mubr.f32.mxu0 0.0
    %198 = vmatmul.mubr.f32.gmra.mrb[0].mxu0 %v90
    %v199 = vpop.f32.mrb[0].mxu0
    %v200 = vadd.f32 %v116, %v199
    %v201 = vpop.f32.mrb[0].mxu0
    %202 = vmatprep.mubr.f32.mxu0 0.0
    %203 = vmatmul.mubr.f32.gmra.mrb[0].mxu0 %v91
    %v204 = vpop.f32.mrb[0].mxu0
    %v205 = vadd.f32 %v116, %v204
    %v206 = vpop.f32.mrb[0].mxu0
    %207 = vmatprep.mubr.f32.mxu0 0.0
    %208 = vmatmul.mubr.f32.gmra.mrb[0].mxu0 %v92
    %v209 = vpop.f32.mrb[0].mxu0
    %v210 = vadd.f32 %v116, %v209
    %v211 = vpop.f32.mrb[0].mxu0
    %212 = vmatprep.mubr.f32.mxu0 0.0
    %213 = vmatmul.mubr.f32.gmra.mrb[0].mxu0 %v93
    %v214 = vpop.f32.mrb[0].mxu0
    %v215 = vadd.f32 %v116, %v214
    %v216 = vpop.f32.mrb[0].mxu0
    %217 = vmatprep.mubr.f32.mxu0 0.0
    %218 = vmatmul.mubr.f32.gmra.mrb[0].mxu0 %v94
    %v219 = vpop.f32.mrb[0].mxu0
    %v220 = vadd.f32 %v116, %v219
    %v221 = vpop.f32.mrb[0].mxu0
    %222 = vdwg.mxu0
    %223 = vst [vmem:[#allocation12] sm:$0xff] %v185
    %224 = vst [vmem:[#allocation12 + $0x8] sm:$0xff] %v190
    %225 = vst [vmem:[#allocation12 + $0x10] sm:$0xff] %v195
    %226 = vst [vmem:[#allocation12 + $0x18] sm:$0xff] %v200
    %227 = vst [vmem:[#allocation12 + $0x20] sm:$0xff] %v205
    %228 = vst [vmem:[#allocation12 + $0x28] sm:$0xff] %v210
    %229 = vst [vmem:[#allocation12 + $0x30] sm:$0xff] %v215
    %230 = vst [vmem:[#allocation12 + $0x38] sm:$0xff] %v220
    %v231 = vld [vmem:[#allocation8] sm:$0xff]
    %v232 = vld [vmem:[#allocation8 + $0x8] sm:$0xff]
    %v233 = vld [vmem:[#allocation8 + $0x10] sm:$0xff]
    %v234 = vld [vmem:[#allocation8 + $0x18] sm:$0xff]
    %v235 = vld [vmem:[#allocation8 + $0x20] sm:$0xff]
    %v236 = vld [vmem:[#allocation8 + $0x28] sm:$0xff]
    %v237 = vld [vmem:[#allocation8 + $0x30] sm:$0xff]
    %v238 = vld [vmem:[#allocation8 + $0x38] sm:$0xff]
    %v239 = vld [vmem:[#allocation8 + $0x40] sm:$0xff]
    %v240 = vld [vmem:[#allocation8 + $0x48] sm:$0xff]
    %v241 = vld [vmem:[#allocation8 + $0x50] sm:$0xff]
    %v242 = vld [vmem:[#allocation8 + $0x58] sm:$0xff]
    %v243 = vld [vmem:[#allocation8 + $0x60] sm:$0xff]
    %v244 = vld [vmem:[#allocation8 + $0x68] sm:$0xff]
    %v245 = vld [vmem:[#allocation8 + $0x70] sm:$0xff]
    %v246 = vld [vmem:[#allocation8 + $0x78] sm:$0xff]
    %v247 = vld [vmem:[#allocation2] sm:$0xff]
    %v248 = vld [vmem:[#allocation12] sm:$0xff]
    %249 = vmatprep.subr.mxu0 0.0
    %250 = vmatpush1.msra.mxu0 %v231
    %251 = vmatprep.subr.mxu0 0.0
    %252 = vmatpush1.msra.mxu0 %v232
    %253 = vmatprep.subr.mxu0 0.0
    %254 = vmatpush1.msra.mxu0 %v233
    %255 = vmatprep.subr.mxu0 0.0
    %256 = vmatpush1.msra.mxu0 %v234
    %257 = vmatprep.subr.mxu0 0.0
    %258 = vmatpush1.msra.mxu0 %v235
    %259 = vmatprep.subr.mxu0 0.0
    %260 = vmatpush1.msra.mxu0 %v236
    %261 = vmatprep.subr.mxu0 0.0
    %262 = vmatpush1.msra.mxu0 %v237
    %263 = vmatprep.subr.mxu0 0.0
    %264 = vmatpush1.msra.mxu0 %v238
    %265 = vmatprep.subr.mxu0 0.0
    %266 = vmatpush1.msra.mxu0 %v239
    %267 = vmatprep.subr.mxu0 0.0
    %268 = vmatpush1.msra.mxu0 %v240
    %269 = vmatprep.subr.mxu0 0.0
    %270 = vmatpush1.msra.mxu0 %v241
    %271 = vmatprep.subr.mxu0 0.0
    %272 = vmatpush1.msra.mxu0 %v242
    %273 = vmatprep.subr.mxu0 0.0
    %274 = vmatpush1.msra.mxu0 %v243
    %275 = vmatprep.subr.mxu0 0.0
    %276 = vmatpush1.msra.mxu0 %v244
    %277 = vmatprep.subr.mxu0 0.0
    %278 = vmatpush1.msra.mxu0 %v245
    %279 = vmatprep.subr.mxu0 0.0
    %280 = vmatpush1.msra.mxu0 %v246
    %281 = vmatprep.subr.mxu0 0.0
    %282 = vmatpush1.msra.mxu0 0.0
    %283 = vmatprep.subr.mxu0 0.0
    %284 = vmatpush1.msra.mxu0 0.0
    %285 = vmatprep.subr.mxu0 0.0
    %286 = vmatpush1.msra.mxu0 0.0
    %287 = vmatprep.subr.mxu0 0.0
    %288 = vmatpush1.msra.mxu0 0.0
    %289 = vmatprep.subr.mxu0 0.0
    %290 = vmatpush1.msra.mxu0 0.0
    %291 = vmatprep.subr.mxu0 0.0
    %292 = vmatpush1.msra.mxu0 0.0
    %293 = vmatprep.subr.mxu0 0.0
    %294 = vmatpush1.msra.mxu0 0.0
    %295 = vmatprep.subr.mxu0 0.0
    %296 = vmatpush1.msra.mxu0 0.0
    %297 = vmatprep.subr.mxu0 0.0
    %298 = vmatpush1.msra.mxu0 0.0
    %299 = vmatprep.subr.mxu0 0.0
    %300 = vmatpush1.msra.mxu0 0.0
    %301 = vmatprep.subr.mxu0 0.0
    %302 = vmatpush1.msra.mxu0 0.0
    %303 = vmatprep.subr.mxu0 0.0
    %304 = vmatpush1.msra.mxu0 0.0
    %305 = vmatprep.subr.mxu0 0.0
    %306 = vmatpush1.msra.mxu0 0.0
    %307 = vmatprep.subr.mxu0 0.0
    %308 = vmatpush1.msra.mxu0 0.0
    %309 = vmatprep.subr.mxu0 0.0
    %310 = vmatpush1.msra.mxu0 0.0
    %311 = vmatprep.subr.mxu0 0.0
    %312 = vmatpush1.msra.mxu0 0.0
    %313 = vmatprep.mubr.f32.mxu0 0.0
    %314 = vmatmul.mubr.f32.gmra.mrb[0].mxu0 %v247
    %v315 = vpop.f32.mrb[0].mxu0
    %v316 = vadd.f32 0.0, %v315
    %v317 = vpop.f32.mrb[0].mxu0
    %318 = vdwg.mxu0
    %v319 = vadd.f32 %v248, %v316
    %v320 = vmax.f32 %v319, 0.0
    %321 = vst [vmem:[#allocation12] sm:$0xff] %v320
    %s322 = scalar_lea.vmem [#allocation12], 8
    %v323 = vld [vmem:[%s322] sm:$0xff]
    %324 = vmatprep.subr.mxu0 0.0
    %325 = vmatpush1.msra.mxu0 %v231
    %326 = vmatprep.subr.mxu0 0.0
    %327 = vmatpush1.msra.mxu0 %v232
    %328 = vmatprep.subr.mxu0 0.0
    %329 = vmatpush1.msra.mxu0 %v233
    %330 = vmatprep.subr.mxu0 0.0
    %331 = vmatpush1.msra.mxu0 %v234
    %332 = vmatprep.subr.mxu0 0.0
    %333 = vmatpush1.msra.mxu0 %v235
    %334 = vmatprep.subr.mxu0 0.0
    %335 = vmatpush1.msra.mxu0 %v236
    %336 = vmatprep.subr.mxu0 0.0
    %337 = vmatpush1.msra.mxu0 %v237
    %338 = vmatprep.subr.mxu0 0.0
    %339 = vmatpush1.msra.mxu0 %v238
    %340 = vmatprep.subr.mxu0 0.0
    %341 = vmatpush1.msra.mxu0 %v239
    %342 = vmatprep.subr.mxu0 0.0
    %343 = vmatpush1.msra.mxu0 %v240
    %344 = vmatprep.subr.mxu0 0.0
    %345 = vmatpush1.msra.mxu0 %v241
    %346 = vmatprep.subr.mxu0 0.0
    %347 = vmatpush1.msra.mxu0 %v242
    %348 = vmatprep.subr.mxu0 0.0
    %349 = vmatpush1.msra.mxu0 %v243
    %350 = vmatprep.subr.mxu0 0.0
    %351 = vmatpush1.msra.mxu0 %v244
    %352 = vmatprep.subr.mxu0 0.0
    %353 = vmatpush1.msra.mxu0 %v245
    %354 = vmatprep.subr.mxu0 0.0
    %355 = vmatpush1.msra.mxu0 %v246
    %356 = vmatprep.subr.mxu0 0.0
    %357 = vmatpush1.msra.mxu0 0.0
    %358 = vmatprep.subr.mxu0 0.0
    %359 = vmatpush1.msra.mxu0 0.0
    %360 = vmatprep.subr.mxu0 0.0
    %361 = vmatpush1.msra.mxu0 0.0
    %362 = vmatprep.subr.mxu0 0.0
    %363 = vmatpush1.msra.mxu0 0.0
    %364 = vmatprep.subr.mxu0 0.0
    %365 = vmatpush1.msra.mxu0 0.0
    %366 = vmatprep.subr.mxu0 0.0
    %367 = vmatpush1.msra.mxu0 0.0
    %368 = vmatprep.subr.mxu0 0.0
    %369 = vmatpush1.msra.mxu0 0.0
    %370 = vmatprep.subr.mxu0 0.0
    %371 = vmatpush1.msra.mxu0 0.0
    %372 = vmatprep.subr.mxu0 0.0
    %373 = vmatpush1.msra.mxu0 0.0
    %374 = vmatprep.subr.mxu0 0.0
    %375 = vmatpush1.msra.mxu0 0.0
    %376 = vmatprep.subr.mxu0 0.0
    %377 = vmatpush1.msra.mxu0 0.0
    %378 = vmatprep.subr.mxu0 0.0
    %379 = vmatpush1.msra.mxu0 0.0
    %380 = vmatprep.subr.mxu0 0.0
    %381 = vmatpush1.msra.mxu0 0.0
    %382 = vmatprep.subr.mxu0 0.0
    %383 = vmatpush1.msra.mxu0 0.0
    %384 = vmatprep.subr.mxu0 0.0
    %385 = vmatpush1.msra.mxu0 0.0
    %386 = vmatprep.subr.mxu0 0.0
    %387 = vmatpush1.msra.mxu0 0.0
    %388 = vmatprep.mubr.f32.mxu0 0.0
    %389 = vmatmul.mubr.f32.gmra.mrb[0].mxu0 %v320
    %v390 = vpop.f32.mrb[0].mxu0
    %v391 = vadd.f32 0.0, %v390
    %v392 = vpop.f32.mrb[0].mxu0
    %393 = vdwg.mxu0
    %v394 = vadd.f32 %v323, %v391
    %v395 = vmax.f32 %v394, 0.0
    %396 = vst [vmem:[%s322] sm:$0xff] %v395
    %s397 = scalar_lea.vmem [#allocation12], 16
    %v398 = vld [vmem:[%s397] sm:$0xff]
    %399 = vmatprep.subr.mxu0 0.0
    %400 = vmatpush1.msra.mxu0 %v231
    %401 = vmatprep.subr.mxu0 0.0
    %402 = vmatpush1.msra.mxu0 %v232
    %403 = vmatprep.subr.mxu0 0.0
    %404 = vmatpush1.msra.mxu0 %v233
    %405 = vmatprep.subr.mxu0 0.0
    %406 = vmatpush1.msra.mxu0 %v234
    %407 = vmatprep.subr.mxu0 0.0
    %408 = vmatpush1.msra.mxu0 %v235
    %409 = vmatprep.subr.mxu0 0.0
    %410 = vmatpush1.msra.mxu0 %v236
    %411 = vmatprep.subr.mxu0 0.0
    %412 = vmatpush1.msra.mxu0 %v237
    %413 = vmatprep.subr.mxu0 0.0
    %414 = vmatpush1.msra.mxu0 %v238
    %415 = vmatprep.subr.mxu0 0.0
    %416 = vmatpush1.msra.mxu0 %v239
    %417 = vmatprep.subr.mxu0 0.0
    %418 = vmatpush1.msra.mxu0 %v240
    %419 = vmatprep.subr.mxu0 0.0
    %420 = vmatpush1.msra.mxu0 %v241
    %421 = vmatprep.subr.mxu0 0.0
    %422 = vmatpush1.msra.mxu0 %v242
    %423 = vmatprep.subr.mxu0 0.0
    %424 = vmatpush1.msra.mxu0 %v243
    %425 = vmatprep.subr.mxu0 0.0
    %426 = vmatpush1.msra.mxu0 %v244
    %427 = vmatprep.subr.mxu0 0.0
    %428 = vmatpush1.msra.mxu0 %v245
    %429 = vmatprep.subr.mxu0 0.0
    %430 = vmatpush1.msra.mxu0 %v246
    %431 = vmatprep.subr.mxu0 0.0
    %432 = vmatpush1.msra.mxu0 0.0
    %433 = vmatprep.subr.mxu0 0.0
    %434 = vmatpush1.msra.mxu0 0.0
    %435 = vmatprep.subr.mxu0 0.0
    %436 = vmatpush1.msra.mxu0 0.0
    %437 = vmatprep.subr.mxu0 0.0
    %438 = vmatpush1.msra.mxu0 0.0
    %439 = vmatprep.subr.mxu0 0.0
    %440 = vmatpush1.msra.mxu0 0.0
    %441 = vmatprep.subr.mxu0 0.0
    %442 = vmatpush1.msra.mxu0 0.0
    %443 = vmatprep.subr.mxu0 0.0
    %444 = vmatpush1.msra.mxu0 0.0
    %445 = vmatprep.subr.mxu0 0.0
    %446 = vmatpush1.msra.mxu0 0.0
    %447 = vmatprep.subr.mxu0 0.0
    %448 = vmatpush1.msra.mxu0 0.0
    %449 = vmatprep.subr.mxu0 0.0
    %450 = vmatpush1.msra.mxu0 0.0
    %451 = vmatprep.subr.mxu0 0.0
    %452 = vmatpush1.msra.mxu0 0.0
    %453 = vmatprep.subr.mxu0 0.0
    %454 = vmatpush1.msra.mxu0 0.0
    %455 = vmatprep.subr.mxu0 0.0
    %456 = vmatpush1.msra.mxu0 0.0
    %457 = vmatprep.subr.mxu0 0.0
    %458 = vmatpush1.msra.mxu0 0.0
    %459 = vmatprep.subr.mxu0 0.0
    %460 = vmatpush1.msra.mxu0 0.0
    %461 = vmatprep.subr.mxu0 0.0
    %462 = vmatpush1.msra.mxu0 0.0
    %463 = vmatprep.mubr.f32.mxu0 0.0
    %464 = vmatmul.mubr.f32.gmra.mrb[0].mxu0 %v395
    %v465 = vpop.f32.mrb[0].mxu0
    %v466 = vadd.f32 0.0, %v465
    %v467 = vpop.f32.mrb[0].mxu0
    %468 = vdwg.mxu0
    %v469 = vadd.f32 %v398, %v466
    %v470 = vmax.f32 %v469, 0.0
    %471 = vst [vmem:[%s397] sm:$0xff] %v470
    %s472 = scalar_lea.vmem [#allocation12], 24
    %v473 = vld [vmem:[%s472] sm:$0xff]
    %474 = vmatprep.subr.mxu0 0.0
    %475 = vmatpush1.msra.mxu0 %v231
    %476 = vmatprep.subr.mxu0 0.0
    %477 = vmatpush1.msra.mxu0 %v232
    %478 = vmatprep.subr.mxu0 0.0
    %479 = vmatpush1.msra.mxu0 %v233
    %480 = vmatprep.subr.mxu0 0.0
    %481 = vmatpush1.msra.mxu0 %v234
    %482 = vmatprep.subr.mxu0 0.0
    %483 = vmatpush1.msra.mxu0 %v235
    %484 = vmatprep.subr.mxu0 0.0
    %485 = vmatpush1.msra.mxu0 %v236
    %486 = vmatprep.subr.mxu0 0.0
    %487 = vmatpush1.msra.mxu0 %v237
    %488 = vmatprep.subr.mxu0 0.0
    %489 = vmatpush1.msra.mxu0 %v238
    %490 = vmatprep.subr.mxu0 0.0
    %491 = vmatpush1.msra.mxu0 %v239
    %492 = vmatprep.subr.mxu0 0.0
    %493 = vmatpush1.msra.mxu0 %v240
    %494 = vmatprep.subr.mxu0 0.0
    %495 = vmatpush1.msra.mxu0 %v241
    %496 = vmatprep.subr.mxu0 0.0
    %497 = vmatpush1.msra.mxu0 %v242
    %498 = vmatprep.subr.mxu0 0.0
    %499 = vmatpush1.msra.mxu0 %v243
    %500 = vmatprep.subr.mxu0 0.0
    %501 = vmatpush1.msra.mxu0 %v244
    %502 = vmatprep.subr.mxu0 0.0
    %503 = vmatpush1.msra.mxu0 %v245
    %504 = vmatprep.subr.mxu0 0.0
    %505 = vmatpush1.msra.mxu0 %v246
    %506 = vmatprep.subr.mxu0 0.0
    %507 = vmatpush1.msra.mxu0 0.0
    %508 = vmatprep.subr.mxu0 0.0
    %509 = vmatpush1.msra.mxu0 0.0
    %510 = vmatprep.subr.mxu0 0.0
    %511 = vmatpush1.msra.mxu0 0.0
    %512 = vmatprep.subr.mxu0 0.0
    %513 = vmatpush1.msra.mxu0 0.0
    %514 = vmatprep.subr.mxu0 0.0
    %515 = vmatpush1.msra.mxu0 0.0
    %516 = vmatprep.subr.mxu0 0.0
    %517 = vmatpush1.msra.mxu0 0.0
    %518 = vmatprep.subr.mxu0 0.0
    %519 = vmatpush1.msra.mxu0 0.0
    %520 = vmatprep.subr.mxu0 0.0
    %521 = vmatpush1.msra.mxu0 0.0
    %522 = vmatprep.subr.mxu0 0.0
    %523 = vmatpush1.msra.mxu0 0.0
    %524 = vmatprep.subr.mxu0 0.0
    %525 = vmatpush1.msra.mxu0 0.0
    %526 = vmatprep.subr.mxu0 0.0
    %527 = vmatpush1.msra.mxu0 0.0
    %528 = vmatprep.subr.mxu0 0.0
    %529 = vmatpush1.msra.mxu0 0.0
    %530 = vmatprep.subr.mxu0 0.0
    %531 = vmatpush1.msra.mxu0 0.0
    %532 = vmatprep.subr.mxu0 0.0
    %533 = vmatpush1.msra.mxu0 0.0
    %534 = vmatprep.subr.mxu0 0.0
    %535 = vmatpush1.msra.mxu0 0.0
    %536 = vmatprep.subr.mxu0 0.0
    %537 = vmatpush1.msra.mxu0 0.0
    %538 = vmatprep.mubr.f32.mxu0 0.0
    %539 = vmatmul.mubr.f32.gmra.mrb[0].mxu0 %v470
    %v540 = vpop.f32.mrb[0].mxu0
    %v541 = vadd.f32 0.0, %v540
    %v542 = vpop.f32.mrb[0].mxu0
    %543 = vdwg.mxu0
    %v544 = vadd.f32 %v473, %v541
    %v545 = vmax.f32 %v544, 0.0
    %546 = vst [vmem:[%s472] sm:$0xff] %v545
    %s547 = scalar_lea.vmem [#allocation12], 32
    %v548 = vld [vmem:[%s547] sm:$0xff]
    %549 = vmatprep.subr.mxu0 0.0
    %550 = vmatpush1.msra.mxu0 %v231
    %551 = vmatprep.subr.mxu0 0.0
    %552 = vmatpush1.msra.mxu0 %v232
    %553 = vmatprep.subr.mxu0 0.0
    %554 = vmatpush1.msra.mxu0 %v233
    %555 = vmatprep.subr.mxu0 0.0
    %556 = vmatpush1.msra.mxu0 %v234
    %557 = vmatprep.subr.mxu0 0.0
    %558 = vmatpush1.msra.mxu0 %v235
    %559 = vmatprep.subr.mxu0 0.0
    %560 = vmatpush1.msra.mxu0 %v236
    %561 = vmatprep.subr.mxu0 0.0
    %562 = vmatpush1.msra.mxu0 %v237
    %563 = vmatprep.subr.mxu0 0.0
    %564 = vmatpush1.msra.mxu0 %v238
    %565 = vmatprep.subr.mxu0 0.0
    %566 = vmatpush1.msra.mxu0 %v239
    %567 = vmatprep.subr.mxu0 0.0
    %568 = vmatpush1.msra.mxu0 %v240
    %569 = vmatprep.subr.mxu0 0.0
    %570 = vmatpush1.msra.mxu0 %v241
    %571 = vmatprep.subr.mxu0 0.0
    %572 = vmatpush1.msra.mxu0 %v242
    %573 = vmatprep.subr.mxu0 0.0
    %574 = vmatpush1.msra.mxu0 %v243
    %575 = vmatprep.subr.mxu0 0.0
    %576 = vmatpush1.msra.mxu0 %v244
    %577 = vmatprep.subr.mxu0 0.0
    %578 = vmatpush1.msra.mxu0 %v245
    %579 = vmatprep.subr.mxu0 0.0
    %580 = vmatpush1.msra.mxu0 %v246
    %581 = vmatprep.subr.mxu0 0.0
    %582 = vmatpush1.msra.mxu0 0.0
    %583 = vmatprep.subr.mxu0 0.0
    %584 = vmatpush1.msra.mxu0 0.0
    %585 = vmatprep.subr.mxu0 0.0
    %586 = vmatpush1.msra.mxu0 0.0
    %587 = vmatprep.subr.mxu0 0.0
    %588 = vmatpush1.msra.mxu0 0.0
    %589 = vmatprep.subr.mxu0 0.0
    %590 = vmatpush1.msra.mxu0 0.0
    %591 = vmatprep.subr.mxu0 0.0
    %592 = vmatpush1.msra.mxu0 0.0
    %593 = vmatprep.subr.mxu0 0.0
    %594 = vmatpush1.msra.mxu0 0.0
    %595 = vmatprep.subr.mxu0 0.0
    %596 = vmatpush1.msra.mxu0 0.0
    %597 = vmatprep.subr.mxu0 0.0
    %598 = vmatpush1.msra.mxu0 0.0
    %599 = vmatprep.subr.mxu0 0.0
    %600 = vmatpush1.msra.mxu0 0.0
    %601 = vmatprep.subr.mxu0 0.0
    %602 = vmatpush1.msra.mxu0 0.0
    %603 = vmatprep.subr.mxu0 0.0
    %604 = vmatpush1.msra.mxu0 0.0
    %605 = vmatprep.subr.mxu0 0.0
    %606 = vmatpush1.msra.mxu0 0.0
    %607 = vmatprep.subr.mxu0 0.0
    %608 = vmatpush1.msra.mxu0 0.0
    %609 = vmatprep.subr.mxu0 0.0
    %610 = vmatpush1.msra.mxu0 0.0
    %611 = vmatprep.subr.mxu0 0.0
    %612 = vmatpush1.msra.mxu0 0.0
    %613 = vmatprep.mubr.f32.mxu0 0.0
    %614 = vmatmul.mubr.f32.gmra.mrb[0].mxu0 %v545
    %v615 = vpop.f32.mrb[0].mxu0
    %v616 = vadd.f32 0.0, %v615
    %v617 = vpop.f32.mrb[0].mxu0
    %618 = vdwg.mxu0
    %v619 = vadd.f32 %v548, %v616
    %v620 = vmax.f32 %v619, 0.0
    %621 = vst [vmem:[%s547] sm:$0xff] %v620
    %s622 = scalar_lea.vmem [#allocation12], 40
    %v623 = vld [vmem:[%s622] sm:$0xff]
    %624 = vmatprep.subr.mxu0 0.0
    %625 = vmatpush1.msra.mxu0 %v231
    %626 = vmatprep.subr.mxu0 0.0
    %627 = vmatpush1.msra.mxu0 %v232
    %628 = vmatprep.subr.mxu0 0.0
    %629 = vmatpush1.msra.mxu0 %v233
    %630 = vmatprep.subr.mxu0 0.0
    %631 = vmatpush1.msra.mxu0 %v234
    %632 = vmatprep.subr.mxu0 0.0
    %633 = vmatpush1.msra.mxu0 %v235
    %634 = vmatprep.subr.mxu0 0.0
    %635 = vmatpush1.msra.mxu0 %v236
    %636 = vmatprep.subr.mxu0 0.0
    %637 = vmatpush1.msra.mxu0 %v237
    %638 = vmatprep.subr.mxu0 0.0
    %639 = vmatpush1.msra.mxu0 %v238
    %640 = vmatprep.subr.mxu0 0.0
    %641 = vmatpush1.msra.mxu0 %v239
    %642 = vmatprep.subr.mxu0 0.0
    %643 = vmatpush1.msra.mxu0 %v240
    %644 = vmatprep.subr.mxu0 0.0
    %645 = vmatpush1.msra.mxu0 %v241
    %646 = vmatprep.subr.mxu0 0.0
    %647 = vmatpush1.msra.mxu0 %v242
    %648 = vmatprep.subr.mxu0 0.0
    %649 = vmatpush1.msra.mxu0 %v243
    %650 = vmatprep.subr.mxu0 0.0
    %651 = vmatpush1.msra.mxu0 %v244
    %652 = vmatprep.subr.mxu0 0.0
    %653 = vmatpush1.msra.mxu0 %v245
    %654 = vmatprep.subr.mxu0 0.0
    %655 = vmatpush1.msra.mxu0 %v246
    %656 = vmatprep.subr.mxu0 0.0
    %657 = vmatpush1.msra.mxu0 0.0
    %658 = vmatprep.subr.mxu0 0.0
    %659 = vmatpush1.msra.mxu0 0.0
    %660 = vmatprep.subr.mxu0 0.0
    %661 = vmatpush1.msra.mxu0 0.0
    %662 = vmatprep.subr.mxu0 0.0
    %663 = vmatpush1.msra.mxu0 0.0
    %664 = vmatprep.subr.mxu0 0.0
    %665 = vmatpush1.msra.mxu0 0.0
    %666 = vmatprep.subr.mxu0 0.0
    %667 = vmatpush1.msra.mxu0 0.0
    %668 = vmatprep.subr.mxu0 0.0
    %669 = vmatpush1.msra.mxu0 0.0
    %670 = vmatprep.subr.mxu0 0.0
    %671 = vmatpush1.msra.mxu0 0.0
    %672 = vmatprep.subr.mxu0 0.0
    %673 = vmatpush1.msra.mxu0 0.0
    %674 = vmatprep.subr.mxu0 0.0
    %675 = vmatpush1.msra.mxu0 0.0
    %676 = vmatprep.subr.mxu0 0.0
    %677 = vmatpush1.msra.mxu0 0.0
    %678 = vmatprep.subr.mxu0 0.0
    %679 = vmatpush1.msra.mxu0 0.0
    %680 = vmatprep.subr.mxu0 0.0
    %681 = vmatpush1.msra.mxu0 0.0
    %682 = vmatprep.subr.mxu0 0.0
    %683 = vmatpush1.msra.mxu0 0.0
    %684 = vmatprep.subr.mxu0 0.0
    %685 = vmatpush1.msra.mxu0 0.0
    %686 = vmatprep.subr.mxu0 0.0
    %687 = vmatpush1.msra.mxu0 0.0
    %688 = vmatprep.mubr.f32.mxu0 0.0
    %689 = vmatmul.mubr.f32.gmra.mrb[0].mxu0 %v620
    %v690 = vpop.f32.mrb[0].mxu0
    %v691 = vadd.f32 0.0, %v690
    %v692 = vpop.f32.mrb[0].mxu0
    %693 = vdwg.mxu0
    %v694 = vadd.f32 %v623, %v691
    %v695 = vmax.f32 %v694, 0.0
    %696 = vst [vmem:[%s622] sm:$0xff] %v695
    %s697 = scalar_lea.vmem [#allocation12], 48
    %v698 = vld [vmem:[%s697] sm:$0xff]
    %699 = vmatprep.subr.mxu0 0.0
    %700 = vmatpush1.msra.mxu0 %v231
    %701 = vmatprep.subr.mxu0 0.0
    %702 = vmatpush1.msra.mxu0 %v232
    %703 = vmatprep.subr.mxu0 0.0
    %704 = vmatpush1.msra.mxu0 %v233
    %705 = vmatprep.subr.mxu0 0.0
    %706 = vmatpush1.msra.mxu0 %v234
    %707 = vmatprep.subr.mxu0 0.0
    %708 = vmatpush1.msra.mxu0 %v235
    %709 = vmatprep.subr.mxu0 0.0
    %710 = vmatpush1.msra.mxu0 %v236
    %711 = vmatprep.subr.mxu0 0.0
    %712 = vmatpush1.msra.mxu0 %v237
    %713 = vmatprep.subr.mxu0 0.0
    %714 = vmatpush1.msra.mxu0 %v238
    %715 = vmatprep.subr.mxu0 0.0
    %716 = vmatpush1.msra.mxu0 %v239
    %717 = vmatprep.subr.mxu0 0.0
    %718 = vmatpush1.msra.mxu0 %v240
    %719 = vmatprep.subr.mxu0 0.0
    %720 = vmatpush1.msra.mxu0 %v241
    %721 = vmatprep.subr.mxu0 0.0
    %722 = vmatpush1.msra.mxu0 %v242
    %723 = vmatprep.subr.mxu0 0.0
    %724 = vmatpush1.msra.mxu0 %v243
    %725 = vmatprep.subr.mxu0 0.0
    %726 = vmatpush1.msra.mxu0 %v244
    %727 = vmatprep.subr.mxu0 0.0
    %728 = vmatpush1.msra.mxu0 %v245
    %729 = vmatprep.subr.mxu0 0.0
    %730 = vmatpush1.msra.mxu0 %v246
    %731 = vmatprep.subr.mxu0 0.0
    %732 = vmatpush1.msra.mxu0 0.0
    %733 = vmatprep.subr.mxu0 0.0
    %734 = vmatpush1.msra.mxu0 0.0
    %735 = vmatprep.subr.mxu0 0.0
    %736 = vmatpush1.msra.mxu0 0.0
    %737 = vmatprep.subr.mxu0 0.0
    %738 = vmatpush1.msra.mxu0 0.0
    %739 = vmatprep.subr.mxu0 0.0
    %740 = vmatpush1.msra.mxu0 0.0
    %741 = vmatprep.subr.mxu0 0.0
    %742 = vmatpush1.msra.mxu0 0.0
    %743 = vmatprep.subr.mxu0 0.0
    %744 = vmatpush1.msra.mxu0 0.0
    %745 = vmatprep.subr.mxu0 0.0
    %746 = vmatpush1.msra.mxu0 0.0
    %747 = vmatprep.subr.mxu0 0.0
    %748 = vmatpush1.msra.mxu0 0.0
    %749 = vmatprep.subr.mxu0 0.0
    %750 = vmatpush1.msra.mxu0 0.0
    %751 = vmatprep.subr.mxu0 0.0
    %752 = vmatpush1.msra.mxu0 0.0
    %753 = vmatprep.subr.mxu0 0.0
    %754 = vmatpush1.msra.mxu0 0.0
    %755 = vmatprep.subr.mxu0 0.0
    %756 = vmatpush1.msra.mxu0 0.0
    %757 = vmatprep.subr.mxu0 0.0
    %758 = vmatpush1.msra.mxu0 0.0
    %759 = vmatprep.subr.mxu0 0.0
    %760 = vmatpush1.msra.mxu0 0.0
    %761 = vmatprep.subr.mxu0 0.0
    %762 = vmatpush1.msra.mxu0 0.0
    %763 = vmatprep.mubr.f32.mxu0 0.0
    %764 = vmatmul.mubr.f32.gmra.mrb[0].mxu0 %v695
    %v765 = vpop.f32.mrb[0].mxu0
    %v766 = vadd.f32 0.0, %v765
    %v767 = vpop.f32.mrb[0].mxu0
    %768 = vdwg.mxu0
    %v769 = vadd.f32 %v698, %v766
    %v770 = vmax.f32 %v769, 0.0
    %771 = vst [vmem:[%s697] sm:$0xff] %v770
    %s772 = scalar_lea.vmem [#allocation12], 56
    %v773 = vld [vmem:[%s772] sm:$0xff]
    %774 = vmatprep.subr.mxu0 0.0
    %775 = vmatpush1.msra.mxu0 %v231
    %776 = vmatprep.subr.mxu0 0.0
    %777 = vmatpush1.msra.mxu0 %v232
    %778 = vmatprep.subr.mxu0 0.0
    %779 = vmatpush1.msra.mxu0 %v233
    %780 = vmatprep.subr.mxu0 0.0
    %781 = vmatpush1.msra.mxu0 %v234
    %782 = vmatprep.subr.mxu0 0.0
    %783 = vmatpush1.msra.mxu0 %v235
    %784 = vmatprep.subr.mxu0 0.0
    %785 = vmatpush1.msra.mxu0 %v236
    %786 = vmatprep.subr.mxu0 0.0
    %787 = vmatpush1.msra.mxu0 %v237
    %788 = vmatprep.subr.mxu0 0.0
    %789 = vmatpush1.msra.mxu0 %v238
    %790 = vmatprep.subr.mxu0 0.0
    %791 = vmatpush1.msra.mxu0 %v239
    %792 = vmatprep.subr.mxu0 0.0
    %793 = vmatpush1.msra.mxu0 %v240
    %794 = vmatprep.subr.mxu0 0.0
    %795 = vmatpush1.msra.mxu0 %v241
    %796 = vmatprep.subr.mxu0 0.0
    %797 = vmatpush1.msra.mxu0 %v242
    %798 = vmatprep.subr.mxu0 0.0
    %799 = vmatpush1.msra.mxu0 %v243
    %800 = vmatprep.subr.mxu0 0.0
    %801 = vmatpush1.msra.mxu0 %v244
    %802 = vmatprep.subr.mxu0 0.0
    %803 = vmatpush1.msra.mxu0 %v245
    %804 = vmatprep.subr.mxu0 0.0
    %805 = vmatpush1.msra.mxu0 %v246
    %806 = vmatprep.subr.mxu0 0.0
    %807 = vmatpush1.msra.mxu0 0.0
    %808 = vmatprep.subr.mxu0 0.0
    %809 = vmatpush1.msra.mxu0 0.0
    %810 = vmatprep.subr.mxu0 0.0
    %811 = vmatpush1.msra.mxu0 0.0
    %812 = vmatprep.subr.mxu0 0.0
    %813 = vmatpush1.msra.mxu0 0.0
    %814 = vmatprep.subr.mxu0 0.0
    %815 = vmatpush1.msra.mxu0 0.0
    %816 = vmatprep.subr.mxu0 0.0
    %817 = vmatpush1.msra.mxu0 0.0
    %818 = vmatprep.subr.mxu0 0.0
    %819 = vmatpush1.msra.mxu0 0.0
    %820 = vmatprep.subr.mxu0 0.0
    %821 = vmatpush1.msra.mxu0 0.0
    %822 = vmatprep.subr.mxu0 0.0
    %823 = vmatpush1.msra.mxu0 0.0
    %824 = vmatprep.subr.mxu0 0.0
    %825 = vmatpush1.msra.mxu0 0.0
    %826 = vmatprep.subr.mxu0 0.0
    %827 = vmatpush1.msra.mxu0 0.0
    %828 = vmatprep.subr.mxu0 0.0
    %829 = vmatpush1.msra.mxu0 0.0
    %830 = vmatprep.subr.mxu0 0.0
    %831 = vmatpush1.msra.mxu0 0.0
    %832 = vmatprep.subr.mxu0 0.0
    %833 = vmatpush1.msra.mxu0 0.0
    %834 = vmatprep.subr.mxu0 0.0
    %835 = vmatpush1.msra.mxu0 0.0
    %836 = vmatprep.subr.mxu0 0.0
    %837 = vmatpush1.msra.mxu0 0.0
    %838 = vmatprep.mubr.f32.mxu0 0.0
    %839 = vmatmul.mubr.f32.gmra.mrb[0].mxu0 %v770
    %v840 = vpop.f32.mrb[0].mxu0
    %v841 = vadd.f32 0.0, %v840
    %v842 = vpop.f32.mrb[0].mxu0
    %843 = vdwg.mxu0
    %v844 = vadd.f32 %v773, %v841
    %v845 = vmax.f32 %v844, 0.0
    %846 = vst [vmem:[%s772] sm:$0xff] %v845
    %847 = vst [vmem:[#allocation2] sm:$0xff] %v845
    %v848 = vld [vmem:[#allocation12] sm:$0xff]
    %v849 = vld [vmem:[#allocation12 + $0x8] sm:$0xff]
    %v850 = vld [vmem:[#allocation12 + $0x10] sm:$0xff]
    %v851 = vld [vmem:[#allocation12 + $0x18] sm:$0xff]
    %v852 = vld [vmem:[#allocation12 + $0x20] sm:$0xff]
    %v853 = vld [vmem:[#allocation12 + $0x28] sm:$0xff]
    %v854 = vld [vmem:[#allocation12 + $0x30] sm:$0xff]
    %v855 = vld [vmem:[#allocation12 + $0x38] sm:$0xff]
    %v856 = vld [vmem:[#allocation9] sm:$0xff]
    %v857 = vld [vmem:[#allocation9 + $0x8] sm:$0xff]
    %v858 = vld [vmem:[#allocation9 + $0x10] sm:$0xff]
    %v859 = vld [vmem:[#allocation9 + $0x18] sm:$0xff]
    %v860 = vld [vmem:[#allocation9 + $0x20] sm:$0xff]
    %v861 = vld [vmem:[#allocation9 + $0x28] sm:$0xff]
    %v862 = vld [vmem:[#allocation9 + $0x30] sm:$0xff]
    %v863 = vld [vmem:[#allocation9 + $0x38] sm:$0xff]
    %v864 = vld [vmem:[#allocation9 + $0x40] sm:$0xff]
    %v865 = vld [vmem:[#allocation9 + $0x48] sm:$0xff]
    %v866 = vld [vmem:[#allocation9 + $0x50] sm:$0xff]
    %v867 = vld [vmem:[#allocation9 + $0x58] sm:$0xff]
    %v868 = vld [vmem:[#allocation9 + $0x60] sm:$0xff]
    %v869 = vld [vmem:[#allocation9 + $0x68] sm:$0xff]
    %v870 = vld [vmem:[#allocation9 + $0x70] sm:$0xff]
    %v871 = vld [vmem:[#allocation9 + $0x78] sm:$0xff]
    %v872 = vld [vmem:[%s5] sm:$0x1]
    %v874 = vlaneseq
    %v875 = vshrl.u32 %v874, 7
    %v876 = vsub.s32 0, %v875
    %v877 = vrot.slane %v872, %v876
    %879 = vmatprep.subr.mxu0 0.0
    %880 = vmatpush1.msra.mxu0 %v856
    %881 = vmatprep.subr.mxu0 0.0
    %882 = vmatpush1.msra.mxu0 %v857
    %883 = vmatprep.subr.mxu0 0.0
    %884 = vmatpush1.msra.mxu0 %v858
    %885 = vmatprep.subr.mxu0 0.0
    %886 = vmatpush1.msra.mxu0 %v859
    %887 = vmatprep.subr.mxu0 0.0
    %888 = vmatpush1.msra.mxu0 %v860
    %889 = vmatprep.subr.mxu0 0.0
    %890 = vmatpush1.msra.mxu0 %v861
    %891 = vmatprep.subr.mxu0 0.0
    %892 = vmatpush1.msra.mxu0 %v862
    %893 = vmatprep.subr.mxu0 0.0
    %894 = vmatpush1.msra.mxu0 %v863
    %895 = vmatprep.subr.mxu0 0.0
    %896 = vmatpush1.msra.mxu0 %v864
    %897 = vmatprep.subr.mxu0 0.0
    %898 = vmatpush1.msra.mxu0 %v865
    %899 = vmatprep.subr.mxu0 0.0
    %900 = vmatpush1.msra.mxu0 %v866
    %901 = vmatprep.subr.mxu0 0.0
    %902 = vmatpush1.msra.mxu0 %v867
    %903 = vmatprep.subr.mxu0 0.0
    %904 = vmatpush1.msra.mxu0 %v868
    %905 = vmatprep.subr.mxu0 0.0
    %906 = vmatpush1.msra.mxu0 %v869
    %907 = vmatprep.subr.mxu0 0.0
    %908 = vmatpush1.msra.mxu0 %v870
    %909 = vmatprep.subr.mxu0 0.0
    %910 = vmatpush1.msra.mxu0 %v871
    %911 = vmatprep.subr.mxu0 0.0
    %912 = vmatpush1.msra.mxu0 0.0
    %913 = vmatprep.subr.mxu0 0.0
    %914 = vmatpush1.msra.mxu0 0.0
    %915 = vmatprep.subr.mxu0 0.0
    %916 = vmatpush1.msra.mxu0 0.0
    %917 = vmatprep.subr.mxu0 0.0
    %918 = vmatpush1.msra.mxu0 0.0
    %919 = vmatprep.subr.mxu0 0.0
    %920 = vmatpush1.msra.mxu0 0.0
    %921 = vmatprep.subr.mxu0 0.0
    %922 = vmatpush1.msra.mxu0 0.0
    %923 = vmatprep.subr.mxu0 0.0
    %924 = vmatpush1.msra.mxu0 0.0
    %925 = vmatprep.subr.mxu0 0.0
    %926 = vmatpush1.msra.mxu0 0.0
    %927 = vmatprep.subr.mxu0 0.0
    %928 = vmatpush1.msra.mxu0 0.0
    %929 = vmatprep.subr.mxu0 0.0
    %930 = vmatpush1.msra.mxu0 0.0
    %931 = vmatprep.subr.mxu0 0.0
    %932 = vmatpush1.msra.mxu0 0.0
    %933 = vmatprep.subr.mxu0 0.0
    %934 = vmatpush1.msra.mxu0 0.0
    %935 = vmatprep.subr.mxu0 0.0
    %936 = vmatpush1.msra.mxu0 0.0
    %937 = vmatprep.subr.mxu0 0.0
    %938 = vmatpush1.msra.mxu0 0.0
    %939 = vmatprep.subr.mxu0 0.0
    %940 = vmatpush1.msra.mxu0 0.0
    %941 = vmatprep.subr.mxu0 0.0
    %942 = vmatpush1.msra.mxu0 0.0
    %943 = vmatprep.mubr.f32.mxu0 0.0
    %944 = vmatmul.mubr.f32.gmra.mrb[0].mxu0 %v848
    %v945 = vpop.f32.mrb[0].mxu0
    %v946 = vadd.f32 %v877, %v945
    %v947 = vpop.f32.mrb[0].mxu0
    %948 = vmatprep.mubr.f32.mxu0 0.0
    %949 = vmatmul.mubr.f32.gmra.mrb[0].mxu0 %v849
    %v950 = vpop.f32.mrb[0].mxu0
    %v951 = vadd.f32 %v877, %v950
    %v952 = vpop.f32.mrb[0].mxu0
    %953 = vmatprep.mubr.f32.mxu0 0.0
    %954 = vmatmul.mubr.f32.gmra.mrb[0].mxu0 %v850
    %v955 = vpop.f32.mrb[0].mxu0
    %v956 = vadd.f32 %v877, %v955
    %v957 = vpop.f32.mrb[0].mxu0
    %958 = vmatprep.mubr.f32.mxu0 0.0
    %959 = vmatmul.mubr.f32.gmra.mrb[0].mxu0 %v851
    %v960 = vpop.f32.mrb[0].mxu0
    %v961 = vadd.f32 %v877, %v960
    %v962 = vpop.f32.mrb[0].mxu0
    %963 = vmatprep.mubr.f32.mxu0 0.0
    %964 = vmatmul.mubr.f32.gmra.mrb[0].mxu0 %v852
    %v965 = vpop.f32.mrb[0].mxu0
    %v966 = vadd.f32 %v877, %v965
    %v967 = vpop.f32.mrb[0].mxu0
    %968 = vmatprep.mubr.f32.mxu0 0.0
    %969 = vmatmul.mubr.f32.gmra.mrb[0].mxu0 %v853
    %v970 = vpop.f32.mrb[0].mxu0
    %v971 = vadd.f32 %v877, %v970
    %v972 = vpop.f32.mrb[0].mxu0
    %973 = vmatprep.mubr.f32.mxu0 0.0
    %974 = vmatmul.mubr.f32.gmra.mrb[0].mxu0 %v854
    %v975 = vpop.f32.mrb[0].mxu0
    %v976 = vadd.f32 %v877, %v975
    %v977 = vpop.f32.mrb[0].mxu0
    %978 = vmatprep.mubr.f32.mxu0 0.0
    %979 = vmatmul.mubr.f32.gmra.mrb[0].mxu0 %v855
    %v980 = vpop.f32.mrb[0].mxu0
    %v981 = vadd.f32 %v877, %v980
    %v982 = vpop.f32.mrb[0].mxu0
    %983 = vdwg.mxu0
    %984 = vst [vmem:[#allocation11] sm:$0xff] %v946
    %985 = vst [vmem:[#allocation11 + $0x8] sm:$0xff] %v951
    %986 = vst [vmem:[#allocation11 + $0x10] sm:$0xff] %v956
    %987 = vst [vmem:[#allocation11 + $0x18] sm:$0xff] %v961
    %988 = vst [vmem:[#allocation11 + $0x20] sm:$0xff] %v966
    %989 = vst [vmem:[#allocation11 + $0x28] sm:$0xff] %v971
    %990 = vst [vmem:[#allocation11 + $0x30] sm:$0xff] %v976
    %991 = vst [vmem:[#allocation11 + $0x38] sm:$0xff] %v981
    // Predicated region
    $region46: #{tpu_custom_call.1} parent=1 // pred_check
      _
    $region47: #{tpu_custom_call.1} parent=1 // pred_check_branch
      %993 = sbr.rel (0) target = $region49
    $region48: #{tpu_custom_call.1} parent=1 // pred_region
      %s995 = ssub.s32 1024, 1024
      %996 = vsyncadd [#allocation5], %s995
      %s997 = sshll.u32 [#allocation11], 4
      %s998 = int_to_ptr.vmem [resolvable:$true] %s997
      %1003 = dma.vmem_to_hbm [thread:$0]  %s998, 1024, %s6, [#allocation5], 128, 128, 8
    $region49: #{tpu_custom_call.1} parent=1 // pred_fallthru
      _
    // Predicated region
    $region50: #{tpu_custom_call.1} parent=1 // pred_check
      _
    $region51: #{tpu_custom_call.1} parent=1 // pred_check_branch
      %1005 = sbr.rel (0) target = $region53
    $region52: #{tpu_custom_call.1} parent=1 // pred_region
      %s1007 = ssub.s32 1024, 1024
      %1008 = vsyncadd [#allocation13], %s1007
      %s1009 = sshll.u32 [#allocation12], 4
      %s1010 = int_to_ptr.vmem [resolvable:$true] %s1009
      %1015 = dma.vmem_to_hbm [thread:$0]  %s1010, 1024, %s7, [#allocation13], 128, 128, 8
    $region53: #{tpu_custom_call.1} parent=1 // pred_fallthru
      _
    // Predicated region
    $region54: #{tpu_custom_call.1} parent=1 // pred_check
      _
    $region55: #{tpu_custom_call.1} parent=1 // pred_check_branch
      %1017 = sbr.rel (0) target = $region57
    $region56: #{tpu_custom_call.1} parent=1 // pred_region
      %1018 = dma.done [#allocation5], 1024
    $region57: #{tpu_custom_call.1} parent=1 // pred_fallthru
      _
    // Predicated region
    $region58: #{tpu_custom_call.1} parent=1 // pred_check
      _
    $region59: #{tpu_custom_call.1} parent=1 // pred_check_branch
      %1020 = sbr.rel (0) target = $region61
    $region60: #{tpu_custom_call.1} parent=1 // pred_region
      %1021 = dma.done [#allocation13], 1024
    $region61: #{tpu_custom_call.1} parent=1 // pred_fallthru
      _
    %1022 = vsyncpa [#allocation4], 1
    %1023 = vsyncpa [#allocation7], 1
    %1024 = vsyncpa [#allocation10], 1
    %1025 = vsyncpa [#allocation5], 1
    %1026 = vsyncpa [#allocation13], 1

</llo_original>
